<compile_context>
chip_gen: v6e
topology: v6e:2x2x1
jax: 0.10.0
libtpu: 0.0.40
codegen_flags: <defaults>
</compile_context>

<pallas_src>
import functools

import jax
import jax.numpy as jnp
from jax.experimental import pallas as pl
from jax.experimental.pallas import tpu as pltpu

_LANE = 128


def _min_sublane(dtype) -> int:
    """Minimum sublane granularity for a block of this dtype."""
    itemsize = jnp.dtype(dtype).itemsize
    return max(8, 32 // itemsize)  # f32 -> 8, bf16 -> 16, int8/fp8 -> 32


def _round_up(x: int, m: int) -> int:
    return ((x + m - 1) // m) * m


def _device_kind() -> str:
    try:
        return jax.devices()[0].device_kind.lower()
    except Exception:
        return ""


def _default_num_cores(kind: str) -> int:
    # v7x exposes 2 TensorCores per chip (as do megacore v4/v5p); v5e/v6e have 1,
    # so a size-2 parallel axis there would only add bookkeeping.
    if any(tag in kind for tag in ("v7", "tpu7", "v5p", "v4")):
        return 2
    return 1


def _accumulate(p, t, sum_acc, cnt_acc, row_mask=None):
    """Pure-VPU accumulation of squared diffs and valid counts onto VMEM scratch."""
    valid = t == t  # cheapest "not NaN" predicate (single VALU compare)
    if row_mask is not None:
        valid = jnp.logical_and(valid, row_mask)
    diff = jnp.where(valid, p - t, 0.0)
    sum_acc[...] += diff * diff
    cnt_acc[...] += jnp.where(valid, 1.0, 0.0)


def _rmse_partial_kernel(pred_ref, targ_ref, sum_out_ref, cnt_out_ref,
                         sum_acc, cnt_acc, *, t_rows, tile_t, steps):
    c = pl.program_id(0)   # "parallel" axis (TensorCores)
    i = pl.program_id(1)   # reduction ("arbitrary") axis

    @pl.when(i == 0)
    def _():
        sum_acc[...] = jnp.zeros_like(sum_acc)
        cnt_acc[...] = jnp.zeros_like(cnt_acc)

    p = pred_ref[...].astype(jnp.float32)
    t = targ_ref[...].astype(jnp.float32)

    # Rows of this (logical, unclamped) block that lie inside the real array.
    rows_left = t_rows - (c * steps + i) * tile_t

    @pl.when(rows_left >= tile_t)       # hot path: fully in-bounds block
    def _():
        _accumulate(p, t, sum_acc, cnt_acc)

    @pl.when(rows_left < tile_t)        # ragged tail / redundant (clamped) block
    def _():
        row_ids = jax.lax.broadcasted_iota(jnp.int32, p.shape, 0)
        _accumulate(p, t, sum_acc, cnt_acc, row_mask=row_ids < rows_left)

    @pl.when(i == pl.num_programs(1) - 1)
    def _():
        # One cross-sublane + cross-lane reduce per core (XLU slot; the VPU-only
        # inner loop never uses it), leaving only a scalar epilogue in XLA.
        s = jnp.sum(sum_acc[...], axis=0, keepdims=True)
        sum_out_ref[...] = jnp.sum(s, axis=1, keepdims=True)
        n = jnp.sum(cnt_acc[...], axis=0, keepdims=True)
        cnt_out_ref[...] = jnp.sum(n, axis=1, keepdims=True)


def rmse_loss(y_pred: jax.Array, y_obs: jax.Array, n_samples=None, *,
              num_cores: int | None = None, block_bytes: int = 4 << 20):
    """Pallas RMSE loss. y_pred: (T, B, 1); y_obs: (T, B, C). Returns scalar f32."""
    if y_pred.ndim == 3:
        prediction = y_pred[:, :, 0]
    else:
        prediction = jnp.squeeze(y_pred)
    target = y_obs[:, :, 0]

    if target.size == 0:  # `len(target) > 0` check in the PyTorch module (static)
        return jnp.asarray(0.0, jnp.float32)

    t_rows, batch = target.shape
    p_item = jnp.dtype(prediction.dtype).itemsize
    t_item = jnp.dtype(target.dtype).itemsize

    kind = _device_kind()
    if num_cores is None:
        num_cores = _default_num_cores(kind)
    is_v7x = ("v7" in kind) or ("tpu7" in kind)

    sub = max(_min_sublane(prediction.dtype), _min_sublane(target.dtype))
    lanes = _round_up(batch, _LANE)  # VMEM lane padding of the last dim

    # Largest row tile whose f32-sized footprint stays under `block_bytes`
    # (inputs are <= f32; the two f32 accumulators are the same size).
    budget_rows = max(sub, (block_bytes // (lanes * 4)) // sub * sub)
    tile_t = min(budget_rows, _round_up(pl.cdiv(t_rows, num_cores), sub))
    if tile_t >= t_rows:
        tile_t = t_rows  # single full-extent block; always layout-legal
    total_blocks = pl.cdiv(t_rows, tile_t)
    steps = pl.cdiv(total_blocks, num_cores)
    last_blk = total_blocks - 1

    def in_index_map(c, i):
        # Clamp so redundant blocks (when num_cores*steps > total_blocks) re-read
        # the last valid block instead of reading out of bounds; the kernel masks
        # their contribution to zero via the *unclamped* block index.
        return (jnp.minimum(c * steps + i, last_blk), 0)

    in_kwargs = {}
    if is_v7x:
        # Thin DMA-vs-compute margin on v7x: a third input buffer hides DMA jitter.
        in_kwargs["pipeline_mode"] = pl.Buffered(3)
    in_block = pl.BlockSpec((tile_t, batch), in_index_map, **in_kwargs)
    # Per-core scalar partials; leading core dim squeezed inside the kernel.
    out_block = pl.BlockSpec((None, 1, 1), lambda c, i: (c, 0, 0))

    vmem_limit = (48 if is_v7x else 32) * 1024 * 1024

    cost = pl.CostEstimate(
        flops=7 * t_rows * batch,
        transcendentals=0,
        bytes_accessed=(prediction.size * p_item       # prediction read
                        + y_obs.size * t_item          # strided channel-0 read
                        + 2 * num_cores * 4),          # scalar partials out
    )

    kernel = functools.partial(_rmse_partial_kernel, t_rows=t_rows,
                               tile_t=tile_t, steps=steps)

    sum_part, cnt_part = pl.pallas_call(
        kernel,
        out_shape=(
            jax.ShapeDtypeStruct((num_cores, 1, 1), jnp.float32),
            jax.ShapeDtypeStruct((num_cores, 1, 1), jnp.float32),
        ),
        grid_spec=pltpu.PrefetchScalarGridSpec(
            num_scalar_prefetch=0,
            grid=(num_cores, steps),
            in_specs=[in_block, in_block],
            out_specs=[out_block, out_block],
            scratch_shapes=[
                pltpu.VMEM((tile_t, batch), jnp.float32),  # sum of squared diffs
                pltpu.VMEM((tile_t, batch), jnp.float32),  # count of valid elems
            ],
        ),
        compiler_params=pltpu.CompilerParams(
            dimension_semantics=("parallel", "arbitrary"),
            vmem_limit_bytes=vmem_limit,
            allow_input_fusion=[True, True],  # fuse the channel-0 slices in
        ),
        cost_estimate=cost,
    )(prediction, target)

    total_sum = jnp.sum(sum_part, dtype=jnp.float32)
    total_cnt = jnp.sum(cnt_part, dtype=jnp.float32)
    # Note: if every target is NaN, this returns NaN (matches PyTorch's mean
    # over an empty selection).
    return jnp.sqrt(total_sum / total_cnt)


if __name__ == "__main__":
    key = jax.random.PRNGKey(0)
    k1, k2 = jax.random.split(key)

    T, B, C = 16, 32, 3
    y_pred = jax.random.normal(k1, (T, B, 1), dtype=jnp.float32)
    y_obs = jax.random.normal(k2, (T, B, C), dtype=jnp.float32)

    # Deterministically inject NaNs into the observed target channel.
    nan_mask = (jnp.arange(T)[:, None] + jnp.arange(B)[None, :]) % 5 == 0
    obs0 = jnp.where(nan_mask, jnp.nan, y_obs[:, :, 0])
    y_obs = y_obs.at[:, :, 0].set(obs0)

    n_samples = jnp.array([B], dtype=jnp.int32)  # unused, kept for API parity

    rmse_fn = jax.jit(rmse_loss)  # jit so input slices can fuse into the call
    loss = rmse_fn(y_pred, y_obs, n_samples)
    jax.block_until_ready(loss)

    # Reference check (plain JAX).
    pred = y_pred[:, :, 0]
    targ = y_obs[:, :, 0]
    m = ~jnp.isnan(targ)
    ref = jnp.sqrt(jnp.sum(jnp.where(m, (pred - targ) ** 2, 0.0)) / jnp.sum(m))
    assert jnp.allclose(loss, ref, rtol=1e-5, atol=1e-6), (loss, ref)

    print("KERNEL_OK")
</pallas_src>

<mosaic_0001>
module attributes {stable_mosaic.version = 11 : i64} {
  func.func @_rmse_partial_kernel(%arg0: i32, %arg1: i32, %arg2: memref<16x32xf32, #tpu.memory_space<vmem>>, %arg3: memref<16x32xf32, #tpu.memory_space<vmem>>, %arg4: memref<1x1x1xf32, #tpu.memory_space<vmem>>, %arg5: memref<1x1x1xf32, #tpu.memory_space<vmem>>, %arg6: memref<16x32xf32, #tpu.memory_space<vmem>>, %arg7: memref<16x32xf32, #tpu.memory_space<vmem>>) attributes {dimension_semantics = [#tpu.dimension_semantics<parallel>, #tpu.dimension_semantics<arbitrary>], iteration_bounds = array<i64: 1, 1>, scalar_prefetch = 0 : i64, scratch_operands = 2 : i64, tpu.core_type = #tpu.core_type<tc>, window_params = [{transform_indices = @transform_0, window_bounds = array<i64: 16, 32>}, {transform_indices = @transform_1, window_bounds = array<i64: 16, 32>}, {transform_indices = @transform_2, window_bounds = array<i64: 1, 1, 1>}, {transform_indices = @transform_3, window_bounds = array<i64: 1, 1, 1>}]} {
    %c0_i32 = arith.constant 0 : i32
    %0 = arith.cmpi eq, %arg1, %c0_i32 : i32
    %1 = arith.extui %0 : i1 to i32
    %c0_i32_0 = arith.constant 0 : i32
    %2 = arith.cmpi ne, %1, %c0_i32_0 : i32
    scf.if %2 {
      %cst = arith.constant 0.000000e+00 : f32
      %18 = vector.broadcast %cst : f32 to vector<16x32xf32>
      %c0_11 = arith.constant 0 : index
      %c0_12 = arith.constant 0 : index
      %19 = vector.load %arg6[%c0_11, %c0_12] : memref<16x32xf32, #tpu.memory_space<vmem>>, vector<16x32xf32>
      tpu.vector_store %arg6[%c0_11, %c0_12], %18 {strides = array<i32>} : memref<16x32xf32, #tpu.memory_space<vmem>>, vector<16x32xf32>,
      %cst_13 = arith.constant 0.000000e+00 : f32
      %20 = vector.broadcast %cst_13 : f32 to vector<16x32xf32>
      %c0_14 = arith.constant 0 : index
      %c0_15 = arith.constant 0 : index
      %21 = vector.load %arg7[%c0_14, %c0_15] : memref<16x32xf32, #tpu.memory_space<vmem>>, vector<16x32xf32>
      tpu.vector_store %arg7[%c0_14, %c0_15], %20 {strides = array<i32>} : memref<16x32xf32, #tpu.memory_space<vmem>>, vector<16x32xf32>,
    } else {
    }
    %c0 = arith.constant 0 : index
    %c0_1 = arith.constant 0 : index
    %3 = vector.load %arg2[%c0, %c0_1] : memref<16x32xf32, #tpu.memory_space<vmem>>, vector<16x32xf32>
    %c0_2 = arith.constant 0 : index
    %c0_3 = arith.constant 0 : index
    %4 = vector.load %arg3[%c0_2, %c0_3] : memref<16x32xf32, #tpu.memory_space<vmem>>, vector<16x32xf32>
    %c1_i32 = arith.constant 1 : i32
    %5 = arith.muli %arg0, %c1_i32 : i32
    %6 = arith.addi %5, %arg1 : i32
    %c16_i32 = arith.constant 16 : i32
    %7 = arith.muli %6, %c16_i32 : i32
    %c16_i32_4 = arith.constant 16 : i32
    %8 = arith.subi %c16_i32_4, %7 : i32
    %c16_i32_5 = arith.constant 16 : i32
    %9 = arith.cmpi sge, %8, %c16_i32_5 : i32
    %10 = arith.extui %9 : i1 to i32
    %c0_i32_6 = arith.constant 0 : i32
    %11 = arith.cmpi ne, %10, %c0_i32_6 : i32
    scf.if %11 {
      %18 = arith.cmpf oeq, %4, %4 : vector<16x32xf32>
      %19 = arith.subf %3, %4 : vector<16x32xf32>
      %cst = arith.constant 0.000000e+00 : f32
      %20 = vector.broadcast %cst : f32 to vector<16x32xf32>
      %21 = arith.select %18, %19, %20 : vector<16x32xi1>, vector<16x32xf32>
      %c0_11 = arith.constant 0 : index
      %c0_12 = arith.constant 0 : index
      %22 = vector.load %arg6[%c0_11, %c0_12] : memref<16x32xf32, #tpu.memory_space<vmem>>, vector<16x32xf32>
      %23 = arith.mulf %21, %21 : vector<16x32xf32>
      %24 = arith.addf %22, %23 : vector<16x32xf32>
      %c0_13 = arith.constant 0 : index
      %c0_14 = arith.constant 0 : index
      %25 = vector.load %arg6[%c0_13, %c0_14] : memref<16x32xf32, #tpu.memory_space<vmem>>, vector<16x32xf32>
      tpu.vector_store %arg6[%c0_13, %c0_14], %24 {strides = array<i32>} : memref<16x32xf32, #tpu.memory_space<vmem>>, vector<16x32xf32>,
      %c0_15 = arith.constant 0 : index
      %c0_16 = arith.constant 0 : index
      %26 = vector.load %arg7[%c0_15, %c0_16] : memref<16x32xf32, #tpu.memory_space<vmem>>, vector<16x32xf32>
      %cst_17 = arith.constant 1.000000e+00 : f32
      %cst_18 = arith.constant 0.000000e+00 : f32
      %27 = vector.broadcast %cst_17 : f32 to vector<16x32xf32>
      %28 = vector.broadcast %cst_18 : f32 to vector<16x32xf32>
      %29 = arith.select %18, %27, %28 : vector<16x32xi1>, vector<16x32xf32>
      %30 = arith.addf %26, %29 : vector<16x32xf32>
      %c0_19 = arith.constant 0 : index
      %c0_20 = arith.constant 0 : index
      %31 = vector.load %arg7[%c0_19, %c0_20] : memref<16x32xf32, #tpu.memory_space<vmem>>, vector<16x32xf32>
      tpu.vector_store %arg7[%c0_19, %c0_20], %30 {strides = array<i32>} : memref<16x32xf32, #tpu.memory_space<vmem>>, vector<16x32xf32>,
    } else {
    }
    %c16_i32_7 = arith.constant 16 : i32
    %12 = arith.cmpi slt, %8, %c16_i32_7 : i32
    %13 = arith.extui %12 : i1 to i32
    %c0_i32_8 = arith.constant 0 : i32
    %14 = arith.cmpi ne, %13, %c0_i32_8 : i32
    scf.if %14 {
      %18 = tpu.iota {dimensions = array<i32: 0>} : vector<16x32xi32>
      %19 = vector.broadcast %8 : i32 to vector<16x32xi32>
      %20 = arith.cmpi slt, %18, %19 : vector<16x32xi32>
      %21 = arith.cmpf oeq, %4, %4 : vector<16x32xf32>
      %22 = arith.andi %21, %20 : vector<16x32xi1>
      %23 = arith.subf %3, %4 : vector<16x32xf32>
      %cst = arith.constant 0.000000e+00 : f32
      %24 = vector.broadcast %cst : f32 to vector<16x32xf32>
      %25 = arith.select %22, %23, %24 : vector<16x32xi1>, vector<16x32xf32>
      %c0_11 = arith.constant 0 : index
      %c0_12 = arith.constant 0 : index
      %26 = vector.load %arg6[%c0_11, %c0_12] : memref<16x32xf32, #tpu.memory_space<vmem>>, vector<16x32xf32>
      %27 = arith.mulf %25, %25 : vector<16x32xf32>
      %28 = arith.addf %26, %27 : vector<16x32xf32>
      %c0_13 = arith.constant 0 : index
      %c0_14 = arith.constant 0 : index
      %29 = vector.load %arg6[%c0_13, %c0_14] : memref<16x32xf32, #tpu.memory_space<vmem>>, vector<16x32xf32>
      tpu.vector_store %arg6[%c0_13, %c0_14], %28 {strides = array<i32>} : memref<16x32xf32, #tpu.memory_space<vmem>>, vector<16x32xf32>,
      %c0_15 = arith.constant 0 : index
      %c0_16 = arith.constant 0 : index
      %30 = vector.load %arg7[%c0_15, %c0_16] : memref<16x32xf32, #tpu.memory_space<vmem>>, vector<16x32xf32>
      %cst_17 = arith.constant 1.000000e+00 : f32
      %cst_18 = arith.constant 0.000000e+00 : f32
      %31 = vector.broadcast %cst_17 : f32 to vector<16x32xf32>
      %32 = vector.broadcast %cst_18 : f32 to vector<16x32xf32>
      %33 = arith.select %22, %31, %32 : vector<16x32xi1>, vector<16x32xf32>
      %34 = arith.addf %30, %33 : vector<16x32xf32>
      %c0_19 = arith.constant 0 : index
      %c0_20 = arith.constant 0 : index
      %35 = vector.load %arg7[%c0_19, %c0_20] : memref<16x32xf32, #tpu.memory_space<vmem>>, vector<16x32xf32>
      tpu.vector_store %arg7[%c0_19, %c0_20], %34 {strides = array<i32>} : memref<16x32xf32, #tpu.memory_space<vmem>>, vector<16x32xf32>,
    } else {
    }
    %c0_i32_9 = arith.constant 0 : i32
    %15 = arith.cmpi eq, %arg1, %c0_i32_9 : i32
    %16 = arith.extui %15 : i1 to i32
    %c0_i32_10 = arith.constant 0 : i32
    %17 = arith.cmpi ne, %16, %c0_i32_10 : i32
    scf.if %17 {
      %c0_11 = arith.constant 0 : index
      %c0_12 = arith.constant 0 : index
      %18 = vector.load %arg6[%c0_11, %c0_12] : memref<16x32xf32, #tpu.memory_space<vmem>>, vector<16x32xf32>
      %cst = arith.constant dense<0.000000e+00> : vector<32xf32>
      %19 = vector.multi_reduction <add>, %18, %cst [0] : vector<16x32xf32> to vector<32xf32>
      %20 = vector.shape_cast %19 : vector<32xf32> to vector<1x32xf32>
      %cst_13 = arith.constant dense<0.000000e+00> : vector<1xf32>
      %21 = vector.multi_reduction <add>, %20, %cst_13 [1] : vector<1x32xf32> to vector<1xf32>
      %22 = vector.shape_cast %21 : vector<1xf32> to vector<1x1xf32>
      %c0_14 = arith.constant 0 : index
      %c0_15 = arith.constant 0 : index
      %c0_16 = arith.constant 0 : index
      %23 = vector.load %arg4[%c0_14, %c0_15, %c0_16] : memref<1x1x1xf32, #tpu.memory_space<vmem>>, vector<1x1x1xf32>
      %24 = vector.shape_cast %23 : vector<1x1x1xf32> to vector<1x1xf32>
      %25 = vector.shape_cast %22 : vector<1x1xf32> to vector<1x1x1xf32>
      tpu.vector_store %arg4[%c0_14, %c0_15, %c0_16], %25 {strides = array<i32>} : memref<1x1x1xf32, #tpu.memory_space<vmem>>, vector<1x1x1xf32>,
      %c0_17 = arith.constant 0 : index
      %c0_18 = arith.constant 0 : index
      %26 = vector.load %arg7[%c0_17, %c0_18] : memref<16x32xf32, #tpu.memory_space<vmem>>, vector<16x32xf32>
      %cst_19 = arith.constant dense<0.000000e+00> : vector<32xf32>
      %27 = vector.multi_reduction <add>, %26, %cst_19 [0] : vector<16x32xf32> to vector<32xf32>
      %28 = vector.shape_cast %27 : vector<32xf32> to vector<1x32xf32>
      %cst_20 = arith.constant dense<0.000000e+00> : vector<1xf32>
      %29 = vector.multi_reduction <add>, %28, %cst_20 [1] : vector<1x32xf32> to vector<1xf32>
      %30 = vector.shape_cast %29 : vector<1xf32> to vector<1x1xf32>
      %c0_21 = arith.constant 0 : index
      %c0_22 = arith.constant 0 : index
      %c0_23 = arith.constant 0 : index
      %31 = vector.load %arg5[%c0_21, %c0_22, %c0_23] : memref<1x1x1xf32, #tpu.memory_space<vmem>>, vector<1x1x1xf32>
      %32 = vector.shape_cast %31 : vector<1x1x1xf32> to vector<1x1xf32>
      %33 = vector.shape_cast %30 : vector<1x1xf32> to vector<1x1x1xf32>
      tpu.vector_store %arg5[%c0_21, %c0_22, %c0_23], %33 {strides = array<i32>} : memref<1x1x1xf32, #tpu.memory_space<vmem>>, vector<1x1x1xf32>,
    } else {
    }
    return
  }
  func.func @transform_0(%arg0: i32, %arg1: i32) -> (i32, i32) {
    %c1_i32 = arith.constant 1 : i32
    %0 = arith.muli %arg0, %c1_i32 : i32
    %1 = arith.addi %0, %arg1 : i32
    %c0_i32 = arith.constant 0 : i32
    %2 = arith.minsi %1, %c0_i32 : i32
    %c0_i32_0 = arith.constant 0 : i32
    %c0_i32_1 = arith.constant 0 : i32
    return %2, %c0_i32_0 : i32, i32
  }
  func.func @transform_1(%arg0: i32, %arg1: i32) -> (i32, i32) {
    %c1_i32 = arith.constant 1 : i32
    %0 = arith.muli %arg0, %c1_i32 : i32
    %1 = arith.addi %0, %arg1 : i32
    %c0_i32 = arith.constant 0 : i32
    %2 = arith.minsi %1, %c0_i32 : i32
    %c0_i32_0 = arith.constant 0 : i32
    %c0_i32_1 = arith.constant 0 : i32
    return %2, %c0_i32_0 : i32, i32
  }
  func.func @transform_2(%arg0: i32, %arg1: i32) -> (i32, i32, i32) {
    %c0_i32 = arith.constant 0 : i32
    %c0_i32_0 = arith.constant 0 : i32
    %c0_i32_1 = arith.constant 0 : i32
    return %arg0, %c0_i32, %c0_i32_0 : i32, i32, i32
  }
  func.func @transform_3(%arg0: i32, %arg1: i32) -> (i32, i32, i32) {
    %c0_i32 = arith.constant 0 : i32
    %c0_i32_0 = arith.constant 0 : i32
    %c0_i32_1 = arith.constant 0 : i32
    return %arg0, %c0_i32, %c0_i32_0 : i32, i32, i32
  }
}

</mosaic_0001>

<llo_original>
// kernel: rmse_loss.2
$region0: #{rmse_loss.2}
  #allocation0 [shape = 'u32[]', space=smem, size = 0x4, offset = 0x4, fixed_abs, tag = 'smem constant byte address 0x4 - core index']
  #allocation1 [shape = 'u32[144,128]{1,0:T(1,128)}', space=vmem, size = 0x12000, scoped, tag = 'internal scratch']
  #allocation2 [shape = 'f32[16,32]{1,0:T(8,128)}', space=vmem, size = 0x2000, scoped, tag = 'scratch operand']
  #allocation3 [shape = 'f32[16,32]{1,0:T(8,128)}', space=vmem, size = 0x2000, scoped, tag = 'scratch operand']
  #allocation4 [shape = 'u32[2048]{0}', space=vmem, size = 0x2000, scoped, tag = 'scoped memory for rmse_loss.2']
  #allocation5 [shape = 'u32[2048]{0}', space=vmem, size = 0x2000, scoped, tag = 'scoped memory for rmse_loss.2']
  #allocation6 [shape = 'u32[2048]{0}', space=vmem, size = 0x2000, scoped, tag = 'scoped memory for rmse_loss.2']
  #allocation7 [shape = 'u32[2048]{0}', space=vmem, size = 0x2000, scoped, tag = 'scoped memory for rmse_loss.2']
  #allocation8 [shape = 'u32[2048]{0}', space=vmem, size = 0x2000, scoped, tag = 'scoped memory for rmse_loss.2']
  %s0 = inlined_call_operand.hbm [shape: f32[16,32], index: 0, kind: input, shape index: {}]
  %s1 = inlined_call_operand.hbm [shape: f32[16,32,3], index: 1, kind: input, shape index: {}]
  %s2 = inlined_call_operand.hbm [shape: f32[1,1,1], index: 2, kind: output, shape index: {0}]
  %s3 = inlined_call_operand.hbm [shape: f32[1,1,1], index: 3, kind: output, shape index: {1}]
  %4 = xla_tuple %s2, %s3
  %s5 = sld [smem:[#allocation0]]
  $region50: #{rmse_loss.2} parent=0
    _
  %s7 = ssub.s32 1, %s5
  %s8 = scalar_select 0, %s7, %s5
  $region1: #{rmse_loss.2} parent=0
    #allocation9 [shape = 'u8[8192]{0}', space=vmem, size = 0x2000, scoped, tag = 'input window, operand 0, single buffered']
    #allocation10 [shape = 's32[1]{0}', space=sflag, size = 0x4, scoped, tag = 'scoped memory for rmse_loss.2']
    #allocation11 [shape = 's32[1]{0}', space=sflag, size = 0x4, scoped, tag = 'scoped memory for rmse_loss.2']
    #allocation12 [shape = 'u8[8192]{0}', space=vmem, size = 0x2000, scoped, tag = 'operand span for operand 1']
    #allocation13 [shape = 's32[1]{0}', space=sflag, size = 0x4, scoped, tag = 'scoped memory for rmse_loss.2']
    #allocation14 [shape = 'u8[512]{0}', space=vmem, size = 0x400, scoped, tag = 'output window, operand 0, single buffered']
    #allocation15 [shape = 'u8[512]{0}', space=vmem, size = 0x400, scoped, tag = 'output window, operand 1, single buffered']
    #allocation16 [shape = 's32[1]{0}', space=sflag, size = 0x4, scoped, tag = 'scoped memory for rmse_loss.2']
    #allocation17 [shape = 'u8[8192]{0}', space=vmem, size = 0x2000, dematerialized = true, scoped, tag = 'FusionAdapter Buffer %fusion.1 = f32[16,32]{1,0:T(8,128)} fusion(%param_1.2), kind=kLoop, calls=%fused_computation.1.clone, metadata={op_name="jit(rmse_loss)/squeeze" stack_frame_id=10}']
    %9 = vsyncpa [#allocation10], 0
    %10 = vsyncpa [#allocation13], 0
    %11 = vsyncpa [#allocation11], 0
    %12 = vsyncpa [#allocation16], 0
    // Predicated region
    $region2: #{rmse_loss.2} parent=1 // pred_check
      _
    $region3: #{rmse_loss.2} parent=1 // pred_check_branch
      %14 = sbr.rel (0) target = $region5
    $region4: #{rmse_loss.2} parent=1 // pred_region
      %s15 = sadd.s32 0, 0
      %p16 = scmp.lt.s32.totalorder %s15, 0
      %s17 = scalar_select %p16, %s15, 0
      %s18 = smul.u32 2, %s17
      %s20 = ssub.s32 256, 256
      %21 = vsyncadd [#allocation10], %s20
      %s22 = smul.addr %s18, 128
      %s23 = scalar_lea.hbm %s0, %s22
      %s24 = sshll.u32 [#allocation9], 4
      %s25 = int_to_ptr.vmem [resolvable:$true] %s24
      %30 = dma.hbm_to_vmem [thread:$0]  %s23, 256, %s25, [#allocation10], 128, 128, 8
    $region5: #{rmse_loss.2} parent=1 // pred_fallthru
      _
    // Predicated region
    $region6: #{rmse_loss.2} parent=1 // pred_check
      _
    $region7: #{rmse_loss.2} parent=1 // pred_check_branch
      %32 = sbr.rel (0) target = $region9
    $region8: #{rmse_loss.2} parent=1 // pred_region
      %s33 = sadd.s32 0, 0
      %p34 = scmp.lt.s32.totalorder %s33, 0
      %s35 = scalar_select %p34, %s33, 0
      %s36 = smul.u32 2, %s35
      %s38 = ssub.s32 256, 256
      %39 = vsyncadd [#allocation13], %s38
      %s40 = smul.addr %s36, 128
      %s41 = scalar_lea.hbm %s1, %s40
      %s42 = sshll.u32 [#allocation12], 4
      %s43 = int_to_ptr.vmem [resolvable:$true] %s42
      %48 = dma.hbm_to_vmem [thread:$0]  %s41, 256, %s43, [#allocation13], 128, 128, 8
    $region9: #{rmse_loss.2} parent=1 // pred_fallthru
      _
    // Predicated region
    $region10: #{rmse_loss.2} parent=1 // pred_check
      _
    $region11: #{rmse_loss.2} parent=1 // pred_check_branch
      %50 = sbr.rel (0) target = $region13
    $region12: #{rmse_loss.2} parent=1 // pred_region
      %51 = dma.done [#allocation10], 256
    $region13: #{rmse_loss.2} parent=1 // pred_fallthru
      _
    // Predicated region
    $region14: #{rmse_loss.2} parent=1 // pred_check
      _
    $region15: #{rmse_loss.2} parent=1 // pred_check_branch
      %53 = sbr.rel (0) target = $region17
    $region16: #{rmse_loss.2} parent=1 // pred_region
      %54 = dma.done [#allocation13], 256
    $region17: #{rmse_loss.2} parent=1 // pred_fallthru
      _
    %s55 = sadd.s32 0, 0
    %p56 = scmp.lt.s32.totalorder %s55, 0
    %s57 = scalar_select %p56, %s55, 0
    %s58 = smul.u32 2, %s57
    %s59 = sadd.s32 0, 0
    %p60 = scmp.lt.s32.totalorder %s59, 0
    %s61 = scalar_select %p60, %s59, 0
    %s62 = smul.u32 2, %s61
    %v63 = vld [vmem:[#allocation12] sm:$0xff]
    %s65 = ssub.s32 256, 1
    %66 = vst [vmem:[#allocation17] sm:%s65] %v63
    %s67 = scalar_lea.vmem [#allocation12], 8
    %v68 = vld [vmem:[%s67] sm:$0xff]
    %s69 = scalar_lea.vmem [#allocation17], 8
    %s71 = ssub.s32 256, 1
    %72 = vst [vmem:[%s69] sm:%s71] %v68
    %p73 = scmp.eq.s32.totalorder 0, 0
    // Predicated region
    $region18: #{rmse_loss.2} parent=1 // pred_check
      %p74 = pneg %p73
    $region19: #{rmse_loss.2} parent=1 // pred_check_branch
      %76 = sbr.rel (%p74) target = $region21
    $region20: #{rmse_loss.2} parent=1 // pred_region
      %vm77 = vcmask 261120
      %78 = vst.msk [vmem:[#allocation2] sm:$0xff] %vm77, 0.0
      %79 = vst.msk [vmem:[#allocation2 + $0x8] sm:$0xff] %vm77, 0.0
      %80 = vst.msk [vmem:[#allocation3] sm:$0xff] %vm77, 0.0
      %81 = vst.msk [vmem:[#allocation3 + $0x8] sm:$0xff] %vm77, 0.0
    $region21: #{rmse_loss.2} parent=1 // pred_fallthru
      _
    %v82 = vld [vmem:[#allocation9] sm:$0xff]
    %v83 = vld [vmem:[#allocation9 + $0x8] sm:$0xff]
    %v84 = vld [vmem:[#allocation17] sm:$0xff]
    %v85 = vld [vmem:[#allocation17 + $0x8] sm:$0xff]
    %s86 = sadd.s32 0, 0
    %s87 = smul.u32 %s86, 16
    %s88 = ssub.s32 16, %s87
    %p89 = scmp.ge.s32.totalorder %s88, 16
    // Predicated region
    $region22: #{rmse_loss.2} parent=1 // pred_check
      %p90 = pneg %p89
    $region23: #{rmse_loss.2} parent=1 // pred_check_branch
      %92 = sbr.rel (%p90) target = $region25
    $region24: #{rmse_loss.2} parent=1 // pred_region
      %vm93 = vcmp.eq.f32.partialorder %v84, %v84
      %vm94 = vcmp.eq.f32.partialorder %v85, %v85
      %v95 = vsub.f32 %v82, %v84
      %v96 = vsub.f32 %v83, %v85
      %v97 = vsel %vm93, %v95, 0.0
      %v98 = vsel %vm94, %v96, 0.0
      %v99 = vld [vmem:[#allocation2] sm:$0xff]
      %v100 = vld [vmem:[#allocation2 + $0x8] sm:$0xff]
      %v101 = vmul.f32 %v97, %v97
      %v102 = vmul.f32 %v98, %v98
      %v103 = vadd.f32 %v99, %v101
      %v104 = vadd.f32 %v100, %v102
      %vm105 = vcmask 261120
      %106 = vst.msk [vmem:[#allocation2] sm:$0xff] %vm105, %v103
      %107 = vst.msk [vmem:[#allocation2 + $0x8] sm:$0xff] %vm105, %v104
      %v108 = vld [vmem:[#allocation3] sm:$0xff]
      %v109 = vld [vmem:[#allocation3 + $0x8] sm:$0xff]
      %v110 = vsel %vm93, 1.0, 0.0
      %v111 = vsel %vm94, 1.0, 0.0
      %v112 = vadd.f32 %v108, %v110
      %v113 = vadd.f32 %v109, %v111
      %114 = vst.msk [vmem:[#allocation3] sm:$0xff] %vm105, %v112
      %115 = vst.msk [vmem:[#allocation3 + $0x8] sm:$0xff] %vm105, %v113
    $region25: #{rmse_loss.2} parent=1 // pred_fallthru
      _
    %p116 = scmp.lt.s32.totalorder %s88, 16
    // Predicated region
    $region26: #{rmse_loss.2} parent=1 // pred_check
      %p117 = pneg %p116
    $region27: #{rmse_loss.2} parent=1 // pred_check_branch
      %119 = sbr.rel (%p117) target = $region29
    $region28: #{rmse_loss.2} parent=1 // pred_region
      %v120 = vlaneseq
      %v121 = vshrl.u32 %v120, 7
      %v122 = vadd.s32 %v121, 8
      %v123 = vstv %s88
      %vm124 = vcmp.lt.s32.totalorder %v121, %v123
      %vm125 = vcmp.lt.s32.totalorder %v122, %v123
      %vm126 = vcmp.eq.f32.partialorder %v84, %v84
      %vm127 = vcmp.eq.f32.partialorder %v85, %v85
      %vm128 = vmand %vm126, %vm124
      %vm129 = vmand %vm127, %vm125
      %v130 = vsub.f32 %v82, %v84
      %v131 = vsub.f32 %v83, %v85
      %v132 = vsel %vm128, %v130, 0.0
      %v133 = vsel %vm129, %v131, 0.0
      %v134 = vld [vmem:[#allocation2] sm:$0xff]
      %v135 = vld [vmem:[#allocation2 + $0x8] sm:$0xff]
      %v136 = vmul.f32 %v132, %v132
      %v137 = vmul.f32 %v133, %v133
      %v138 = vadd.f32 %v134, %v136
      %v139 = vadd.f32 %v135, %v137
      %vm140 = vcmask 261120
      %141 = vst.msk [vmem:[#allocation2] sm:$0xff] %vm140, %v138
      %142 = vst.msk [vmem:[#allocation2 + $0x8] sm:$0xff] %vm140, %v139
      %v143 = vld [vmem:[#allocation3] sm:$0xff]
      %v144 = vld [vmem:[#allocation3 + $0x8] sm:$0xff]
      %v145 = vsel %vm128, 1.0, 0.0
      %v146 = vsel %vm129, 1.0, 0.0
      %v147 = vadd.f32 %v143, %v145
      %v148 = vadd.f32 %v144, %v146
      %149 = vst.msk [vmem:[#allocation3] sm:$0xff] %vm140, %v147
      %150 = vst.msk [vmem:[#allocation3 + $0x8] sm:$0xff] %vm140, %v148
    $region29: #{rmse_loss.2} parent=1 // pred_fallthru
      _
    // Predicated region
    $region30: #{rmse_loss.2} parent=1 // pred_check
      %p151 = pneg %p73
    $region31: #{rmse_loss.2} parent=1 // pred_check_branch
      %153 = sbr.rel (%p151) target = $region33
    $region32: #{rmse_loss.2} parent=1 // pred_region
      %v154 = vld [vmem:[#allocation2] sm:$0xff]
      %v155 = vld [vmem:[#allocation2 + $0x8] sm:$0xff]
      %vm156 = vcmask 261120
      %v157 = vsel %vm156, %v154, 0.0
      %v158 = vsel %vm156, %v155, 0.0
      %v159 = vadd.f32 %v157, %v158
      %v160 = vrot.slane %v159, 4
      %v161 = vadd.f32 %v159, %v160
      %v162 = vrot.slane %v161, 2
      %v163 = vadd.f32 %v161, %v162
      %v164 = vrot.slane %v163, 1
      %v165 = vadd.f32 %v163, %v164
      %v166 = vsel %vm156, %v165, 0.0
      %167 = vadd.xlane.f32.xlu0 %v166
      %v168 = vpop.xlane.xlu0 %167
      %vm169 = vcmask 0
      %170 = vst.msk [vmem:[#allocation14] sm:$0x1] %vm169, %v168
      %v171 = vld [vmem:[#allocation3] sm:$0xff]
      %v172 = vld [vmem:[#allocation3 + $0x8] sm:$0xff]
      %v173 = vsel %vm156, %v171, 0.0
      %v174 = vsel %vm156, %v172, 0.0
      %v175 = vadd.f32 %v173, %v174
      %v176 = vrot.slane %v175, 4
      %v177 = vadd.f32 %v175, %v176
      %v178 = vrot.slane %v177, 2
      %v179 = vadd.f32 %v177, %v178
      %v180 = vrot.slane %v179, 1
      %v181 = vadd.f32 %v179, %v180
      %v182 = vsel %vm156, %v181, 0.0
      %183 = vadd.xlane.f32.xlu0 %v182
      %v184 = vpop.xlane.xlu0 %183
      %185 = vst.msk [vmem:[#allocation15] sm:$0x1] %vm169, %v184
    $region33: #{rmse_loss.2} parent=1 // pred_fallthru
      _
    // Predicated region
    $region34: #{rmse_loss.2} parent=1 // pred_check
      _
    $region35: #{rmse_loss.2} parent=1 // pred_check_branch
      %187 = sbr.rel (0) target = $region37
    $region36: #{rmse_loss.2} parent=1 // pred_region
      %s189 = ssub.s32 16, 16
      %190 = vsyncadd [#allocation11], %s189
      %s192 = sshll.u32 [#allocation14], 4
      %s193 = int_to_ptr.vmem [resolvable:$true] %s192
      %195 = dma.vmem_to_hbm [thread:$0]  %s193, 16, %s2, [#allocation11]
    $region37: #{rmse_loss.2} parent=1 // pred_fallthru
      _
    // Predicated region
    $region38: #{rmse_loss.2} parent=1 // pred_check
      _
    $region39: #{rmse_loss.2} parent=1 // pred_check_branch
      %197 = sbr.rel (0) target = $region41
    $region40: #{rmse_loss.2} parent=1 // pred_region
      %s199 = ssub.s32 16, 16
      %200 = vsyncadd [#allocation16], %s199
      %s202 = sshll.u32 [#allocation15], 4
      %s203 = int_to_ptr.vmem [resolvable:$true] %s202
      %205 = dma.vmem_to_hbm [thread:$0]  %s203, 16, %s3, [#allocation16]
    $region41: #{rmse_loss.2} parent=1 // pred_fallthru
      _
    // Predicated region
    $region42: #{rmse_loss.2} parent=1 // pred_check
      _
    $region43: #{rmse_loss.2} parent=1 // pred_check_branch
      %207 = sbr.rel (0) target = $region45
    $region44: #{rmse_loss.2} parent=1 // pred_region
      %208 = dma.done [#allocation11], 16
    $region45: #{rmse_loss.2} parent=1 // pred_fallthru
      _
    // Predicated region
    $region46: #{rmse_loss.2} parent=1 // pred_check
      _
    $region47: #{rmse_loss.2} parent=1 // pred_check_branch
      %210 = sbr.rel (0) target = $region49
    $region48: #{rmse_loss.2} parent=1 // pred_region
      %211 = dma.done [#allocation16], 16
    $region49: #{rmse_loss.2} parent=1 // pred_fallthru
      _
    %212 = vsyncpa [#allocation10], 1
    %213 = vsyncpa [#allocation13], 1
    %214 = vsyncpa [#allocation11], 1
    %215 = vsyncpa [#allocation16], 1

</llo_original>
